<compile_context>
chip_gen: v7x
topology: tpu7x:2x2x1
jax: 0.10.0
libtpu: 0.0.40
codegen_flags: <defaults>
</compile_context>

<pallas_src>
import jax
import jax.numpy as jnp
from jax.experimental import pallas as pl
from jax.experimental.pallas import tpu as pltpu


def _embeddings_kernel(pos_ref, x_ref, o_ref):
    # pos_ref: (1, S+1, H)   position embeddings, CLS token pre-added to row 0
    # x_ref  : (TB, S, H)    patch embeddings for TB batch elements
    # o_ref  : (TB, S+1, H)  output embeddings for TB batch elements
    tb = x_ref.shape[0]
    h = x_ref.shape[-1]
    pos = pos_ref[...]                                        # (1, S1, H)
    cls_rows = jnp.broadcast_to(pos[:, 0:1, :], (tb, 1, h))   # (TB, 1, H)
    body = x_ref[...] + pos[:, 1:, :]                         # (TB, S, H)
    # Single full-tile store (unmasked vst); the 1-row sequence shift is done
    # in-register by the concat instead of as sublane-offset partial stores.
    o_ref[...] = jnp.concatenate([cls_rows, body], axis=1).astype(o_ref.dtype)


def _pick_batch_tile(B, S, H, itemsize, target_bytes=8 * 1024 * 1024):
    """Largest divisor of B whose x-block is <= target_bytes, preferring to
    keep >= 2 grid steps (so v7x's two TensorCores both get work)."""
    divisors = [d for d in range(1, B + 1) if B % d == 0]
    fitting = [d for d in divisors if d * S * H * itemsize <= target_bytes] or [1]
    prefer_two_steps = [d for d in fitting if B // d >= 2]
    return max(prefer_two_steps) if prefer_two_steps else max(fitting)


def embeddings_forward(x, cls_token, position_embeddings, *, block_batch=None):
    """x: (B, S, H); cls_token: (1, 1, H); position_embeddings: (1, S+1, H)."""
    B, S, H = x.shape
    S1 = S + 1
    assert cls_token.shape == (1, 1, H)
    assert position_embeddings.shape == (1, S1, H)

    # Hoist the batch-independent CLS + pos[0] add out of the kernel.
    pos_eff = position_embeddings.at[:, 0:1, :].add(
        cls_token.astype(position_embeddings.dtype)
    )

    itemsize = jnp.dtype(x.dtype).itemsize
    if block_batch is None:
        block_batch = _pick_batch_tile(B, S, H, itemsize)
    TB = block_batch
    assert B % TB == 0, "block_batch must divide batch size"

    # TODO(synk): for hidden sizes < 128 (e.g. the tiny test H=32) the last
    # dim is not lane-dense; real ViT hidden sizes (768+) are fine.

    return pl.pallas_call(
        _embeddings_kernel,
        out_shape=jax.ShapeDtypeStruct((B, S1, H), x.dtype),
        grid_spec=pltpu.PrefetchScalarGridSpec(
            num_scalar_prefetch=0,
            grid=(B // TB,),
            in_specs=[
                pl.BlockSpec((1, S1, H), lambda b: (0, 0, 0)),   # pos_eff (shared)
                pl.BlockSpec((TB, S, H), lambda b: (b, 0, 0)),   # x
            ],
            out_specs=pl.BlockSpec((TB, S1, H), lambda b: (b, 0, 0)),
        ),
        compiler_params=pltpu.CompilerParams(
            dimension_semantics=("parallel",),
            vmem_limit_bytes=48 << 20,
        ),
    )(pos_eff, x)


def _trunc_normal(key, shape, std=0.02, dtype=jnp.float32):
    # trunc_normal_ in PyTorch truncates at +/- 2 std by default.
    return std * jax.random.truncated_normal(key, -2.0, 2.0, shape, dtype)


if __name__ == "__main__":
    B, S, H = 2, 8, 32  # batch, sequence_size, hidden_size

    key = jax.random.PRNGKey(0)
    k_cls, k_pos, k_x = jax.random.split(key, 3)

    # Deterministic parameter init (shapes from module __init__)
    cls_token = _trunc_normal(k_cls, (1, 1, H))
    position_embeddings = _trunc_normal(k_pos, (1, S + 1, H))

    # Example input (patch embeddings)
    x = jax.random.normal(k_x, (B, S, H), dtype=jnp.float32)

    out = embeddings_forward(x, cls_token, position_embeddings)
    out = jax.block_until_ready(out)

    # Reference check in plain JAX
    ref = jnp.concatenate(
        [jnp.broadcast_to(cls_token, (B, 1, H)), x], axis=1
    ) + position_embeddings
    assert out.shape == (B, S + 1, H)
    assert jnp.allclose(out, ref, atol=1e-6), "mismatch vs reference"

    print("KERNEL_OK")
</pallas_src>

<mosaic_0001>
module attributes {stable_mosaic.version = 11 : i64} {
  func.func @_embeddings_kernel(%arg0: i32, %arg1: memref<1x9x32xf32, #tpu.memory_space<vmem>>, %arg2: memref<1x8x32xf32, #tpu.memory_space<vmem>>, %arg3: memref<1x9x32xf32, #tpu.memory_space<vmem>>) attributes {dimension_semantics = [#tpu.dimension_semantics<parallel>], iteration_bounds = array<i64: 2>, scalar_prefetch = 0 : i64, scratch_operands = 0 : i64, tpu.core_type = #tpu.core_type<tc>, window_params = [{pipeline_mode = #tpu.pipeline_mode<synchronous>, transform_indices = @transform_0, window_bounds = array<i64: 1, 9, 32>}, {transform_indices = @transform_1, window_bounds = array<i64: 1, 8, 32>}, {transform_indices = @transform_2, window_bounds = array<i64: 1, 9, 32>}]} {
    %c0 = arith.constant 0 : index
    %c0_0 = arith.constant 0 : index
    %c0_1 = arith.constant 0 : index
    %0 = vector.load %arg1[%c0, %c0_0, %c0_1] : memref<1x9x32xf32, #tpu.memory_space<vmem>>, vector<1x9x32xf32>
    %1 = vector.extract_strided_slice %0 {offsets = [0, 0, 0], sizes = [1, 1, 32], strides = [1, 1, 1]} : vector<1x9x32xf32> to vector<1x1x32xf32>
    %c0_2 = arith.constant 0 : index
    %c0_3 = arith.constant 0 : index
    %c0_4 = arith.constant 0 : index
    %2 = vector.load %arg2[%c0_2, %c0_3, %c0_4] : memref<1x8x32xf32, #tpu.memory_space<vmem>>, vector<1x8x32xf32>
    %3 = vector.extract_strided_slice %0 {offsets = [0, 1, 0], sizes = [1, 8, 32], strides = [1, 1, 1]} : vector<1x9x32xf32> to vector<1x8x32xf32>
    %4 = arith.addf %2, %3 : vector<1x8x32xf32>
    %5 = tpu.concatenate %1, %4 in 1 : vector<1x1x32xf32>, vector<1x8x32xf32> -> vector<1x9x32xf32>
    %c0_5 = arith.constant 0 : index
    %c0_6 = arith.constant 0 : index
    %c0_7 = arith.constant 0 : index
    %6 = vector.load %arg3[%c0_5, %c0_6, %c0_7] : memref<1x9x32xf32, #tpu.memory_space<vmem>>, vector<1x9x32xf32>
    tpu.vector_store %arg3[%c0_5, %c0_6, %c0_7], %5 {strides = array<i32>} : memref<1x9x32xf32, #tpu.memory_space<vmem>>, vector<1x9x32xf32>,
    return
  }
  func.func @transform_0(%arg0: i32) -> (i32, i32, i32) {
    %c0_i32 = arith.constant 0 : i32
    %c0_i32_0 = arith.constant 0 : i32
    %c0_i32_1 = arith.constant 0 : i32
    %c0_i32_2 = arith.constant 0 : i32
    return %c0_i32, %c0_i32_0, %c0_i32_1 : i32, i32, i32
  }
  func.func @transform_1(%arg0: i32) -> (i32, i32, i32) {
    %c0_i32 = arith.constant 0 : i32
    %c0_i32_0 = arith.constant 0 : i32
    %c0_i32_1 = arith.constant 0 : i32
    return %arg0, %c0_i32, %c0_i32_0 : i32, i32, i32
  }
  func.func @transform_2(%arg0: i32) -> (i32, i32, i32) {
    %c0_i32 = arith.constant 0 : i32
    %c0_i32_0 = arith.constant 0 : i32
    %c0_i32_1 = arith.constant 0 : i32
    return %arg0, %c0_i32, %c0_i32_0 : i32, i32, i32
  }
}

</mosaic_0001>

<llo_original>
// kernel: tpu_custom_call.1
$region0: #{tpu_custom_call.1}
  #allocation0 [shape = 'u32[]', space=smem, size = 0x4, offset = 0x4, fixed_abs, tag = 'smem constant byte address 0x4 - core index']
  #allocation1 [shape = 'u32[144,128]{1,0:T(1,128)}', space=vmem, size = 0x12000, scoped, tag = 'internal scratch']
  %s0 = inlined_call_operand.vmem [shape: f32[1,9,32], index: 0, kind: input, shape index: {}]
  %s1 = inlined_call_operand.vmem [shape: f32[2,8,32], index: 1, kind: input, shape index: {}]
  %s2 = inlined_call_operand.vmem [shape: f32[2,9,32], index: 2, kind: output, shape index: {}]
  %s3 = sld [smem:[#allocation0]]
  $region41: #{tpu_custom_call.1} parent=0
    _
  %s5 = ssub.s32 1, %s3
  %s6 = scalar_select 0, %s5, %s3
  loop: start=0, step=1, limit=4
  $region2: #{tpu_custom_call.1} parent=0 // loop_pre_header
    _
  $region3: #{tpu_custom_call.1} parent=0 // loop_header
    %s8 = sphi 0, %s12
    %p9 = scmp.ge.s32.totalorder %s8, 4
    %s16 = sphi 0, %s16
    %s18 = sphi 0, %s16
    %s19 = sphi 0, %s18
    %s33 = sphi 0, %s19
    %s39 = sphi 0, %s41
    %s42 = sphi 0, %s39
    %s43 = sphi 0, %s42
    %s59 = sphi 0, %s43
    %s65 = sphi 0, %s67
    %s68 = sphi 0, %s65
    %s69 = sphi 0, %s68
    %s85 = sphi 0, %s69
  $region4: #{tpu_custom_call.1} parent=0 // loop_header_branch
    %11 = sbr.rel (%p9) target = $region8
  $region5: #{tpu_custom_call.1} parent=0 // loop_body
    %s13 = ssub.s32 %s8, 1
    %s14 = ssub.s32 %s8, 2
    %s15 = sadd.s32 %s8, 1
    %s17 = sadd.s32 %s16, 1
    %p20 = scmp.eq.s32.totalorder %s8, 1
    %p21 = scmp.ne.s32.totalorder %s16, %s18
    %p22 = scmp.eq.s32.totalorder %s8, 0
    %p23 = por %p21, %p22
    %p24 = scmp.ne.s32.totalorder %s16, %s18
    %p25 = scmp.eq.s32.totalorder %s13, 1
    %p26 = por %p24, %p25
    %p27 = scmp.ne.s32.totalorder %s18, %s19
    %p28 = scmp.eq.s32.totalorder %s13, 0
    %p29 = por %p27, %p28
    %p30 = scmp.ne.s32.totalorder %s18, %s19
    %p31 = scmp.eq.s32.totalorder %s14, 1
    %p32 = por %p30, %p31
    %p34 = scmp.ne.s32.totalorder %s19, %s33
    %p35 = scmp.eq.s32.totalorder %s14, 0
    %p36 = por %p34, %p35
    %s37 = ssub.s32 %s8, %s15
    %p38 = scmp.eq.s32.totalorder %s37, 0
    %s40 = sadd.s32 %s39, 1
    %s41 = scalar_select %p38, %s39, %s40
    %p44 = pneg %p38
    %p45 = scmp.eq.s32.totalorder %s8, 1
    %p46 = por %p44, %p45
    %p47 = scmp.ne.s32.totalorder %s39, %s42
    %p48 = scmp.eq.s32.totalorder %s8, 0
    %p49 = por %p47, %p48
    %p50 = scmp.ne.s32.totalorder %s39, %s42
    %p51 = scmp.eq.s32.totalorder %s13, 1
    %p52 = por %p50, %p51
    %p53 = scmp.ne.s32.totalorder %s42, %s43
    %p54 = scmp.eq.s32.totalorder %s13, 0
    %p55 = por %p53, %p54
    %p56 = scmp.ne.s32.totalorder %s42, %s43
    %p57 = scmp.eq.s32.totalorder %s14, 1
    %p58 = por %p56, %p57
    %p60 = scmp.ne.s32.totalorder %s43, %s59
    %p61 = scmp.eq.s32.totalorder %s14, 0
    %p62 = por %p60, %p61
    %s63 = ssub.s32 %s8, %s15
    %p64 = scmp.eq.s32.totalorder %s63, 0
    %s66 = sadd.s32 %s65, 1
    %s67 = scalar_select %p64, %s65, %s66
    %p70 = pneg %p64
    %p71 = scmp.eq.s32.totalorder %s8, 1
    %p72 = por %p70, %p71
    %p73 = scmp.ne.s32.totalorder %s65, %s68
    %p74 = scmp.eq.s32.totalorder %s8, 0
    %p75 = por %p73, %p74
    %p76 = scmp.ne.s32.totalorder %s65, %s68
    %p77 = scmp.eq.s32.totalorder %s13, 1
    %p78 = por %p76, %p77
    %p79 = scmp.ne.s32.totalorder %s68, %s69
    %p80 = scmp.eq.s32.totalorder %s13, 0
    %p81 = por %p79, %p80
    %p82 = scmp.ne.s32.totalorder %s68, %s69
    %p83 = scmp.eq.s32.totalorder %s14, 1
    %p84 = por %p82, %p83
    %p86 = scmp.ne.s32.totalorder %s69, %s85
    %p87 = scmp.eq.s32.totalorder %s14, 0
    %p88 = por %p86, %p87
    %p89 = scmp.le.s32.totalorder 1, %s8
    %p90 = scmp.lt.s32.totalorder %s8, 3
    %p91 = pnand %p89, %p90
    %p92 = pneg %p91
    // Predicated region
    $region9: #{tpu_custom_call.1} parent=5 // pred_check
      _
    $region10: #{tpu_custom_call.1} parent=5 // pred_check_branch
      %94 = sbr.rel (%p91) target = $region12
    $region11: #{tpu_custom_call.1} parent=5 // pred_region
      %s95 = ssub.s32 %s8, 1
      // Predicated region
      $region13: #{tpu_custom_call.1} parent=11 // pred_check
        %p96 = pneg %p29
      $region14: #{tpu_custom_call.1} parent=11 // pred_check_branch
        %98 = sbr.rel (%p96) target = $region16
      $region15: #{tpu_custom_call.1} parent=11 // pred_region
        _
      $region16: #{tpu_custom_call.1} parent=11 // pred_fallthru
        _
    $region12: #{tpu_custom_call.1} parent=5 // pred_fallthru
      _
    %p99 = scmp.lt.s32.totalorder %s8, 2
    // Predicated region
    $region17: #{tpu_custom_call.1} parent=5 // pred_check
      %p100 = pneg %p99
    $region18: #{tpu_custom_call.1} parent=5 // pred_check_branch
      %102 = sbr.rel (%p100) target = $region20
    $region19: #{tpu_custom_call.1} parent=5 // pred_region
      // Predicated region
      $region21: #{tpu_custom_call.1} parent=19 // pred_check
        %p103 = pneg %p49
      $region22: #{tpu_custom_call.1} parent=19 // pred_check_branch
        %105 = sbr.rel (%p103) target = $region24
      $region23: #{tpu_custom_call.1} parent=19 // pred_region
        %p106 = scmp.lt.s32.totalorder %s8, 1
        %s107 = scalar_select %p106, %s8, 1
        %s108 = smul.addr %s107, 8
        %s109 = scalar_lea.vmem %s1, %s108
      $region24: #{tpu_custom_call.1} parent=19 // pred_fallthru
        _
    $region20: #{tpu_custom_call.1} parent=5 // pred_fallthru
      _
    %p110 = scmp.le.s32.totalorder 1, %s8
    %p111 = scmp.lt.s32.totalorder %s8, 3
    %p112 = pnand %p110, %p111
    %p113 = pneg %p112
    // Predicated region
    $region25: #{tpu_custom_call.1} parent=5 // pred_check
      _
    $region26: #{tpu_custom_call.1} parent=5 // pred_check_branch
      %115 = sbr.rel (%p112) target = $region28
    $region27: #{tpu_custom_call.1} parent=5 // pred_region
      %s116 = ssub.s32 %s8, 1
      %p117 = pneg %p29
      %p118 = pneg %p26
      %p119 = scmp.lt.s32.totalorder %s13, 1
      %s120 = scalar_select %p119, %s13, 1
      %s121 = smul.addr %s120, 8
      %s122 = scalar_lea.vmem %s1, %s121
      %p123 = pneg %p55
      %p124 = pneg %p52
      %p125 = pneg %p81
      %p126 = pneg %p78
      %p127 = scmp.lt.s32.totalorder %s13, 1
      %s128 = scalar_select %p127, %s13, 1
      %s129 = smul.addr %s128, 2
      %s130 = smul.addr %s129, 8
      %s131 = scalar_lea.vmem %s2, %s130
      %p132 = scmp.lt.s32.totalorder %s13, 1
      %s133 = scalar_select %p132, %s13, 1
      %s134 = smul.addr %s133, 8
      %s135 = scalar_lea.vmem %s1, %s134
      %p136 = scmp.lt.s32.totalorder %s13, 1
      %s137 = scalar_select %p136, %s13, 1
      %s138 = smul.addr %s137, 2
      %s139 = smul.addr %s138, 8
      %s140 = scalar_lea.vmem %s2, %s139
      %v141 = vld [vmem:[%s0] sm:$0xff]
      %v142 = vld [vmem:[%s0 + $0x8] sm:$0x1]
      %v143 = vld [vmem:[%s135] sm:$0xff]
      %vm146 = vcmask 1046528
      %v147 = vrot.slane %v141, 1
      %v148 = vrot.slane %v142, 1
      %v149 = vsel %vm146, %v147, %v148
      %v151 = vadd.f32 %v143, %v149
      %v153 = vrot.slane %v151, 7
      %vm155 = vcmask 1040384
      %v156 = vsel %vm155, %v141, %v153
      %vm157 = vcmask 261120
      %158 = vst.msk [vmem:[%s140] sm:$0xff] %vm157, %v156
      %vm159 = vcmask 253952
      %160 = vst.msk [vmem:[%s140 + $0x8] sm:$0x1] %vm159, %v153
      %p161 = scmp.lt.s32.totalorder %s13, 1
      %s162 = scalar_select %p161, %s13, 1
      %s163 = smul.addr %s162, 2
      %s164 = smul.addr %s163, 8
      %s165 = scalar_lea.vmem %s2, %s164
      // Predicated region
      $region29: #{tpu_custom_call.1} parent=27 // pred_check
        %p166 = pneg %p78
      $region30: #{tpu_custom_call.1} parent=27 // pred_check_branch
        %168 = sbr.rel (%p166) target = $region32
      $region31: #{tpu_custom_call.1} parent=27 // pred_region
        _
      $region32: #{tpu_custom_call.1} parent=27 // pred_fallthru
        _
    $region28: #{tpu_custom_call.1} parent=5 // pred_fallthru
      _
    %p169 = scmp.le.s32.totalorder 2, %s8
    // Predicated region
    $region33: #{tpu_custom_call.1} parent=5 // pred_check
      %p170 = pneg %p169
    $region34: #{tpu_custom_call.1} parent=5 // pred_check_branch
      %172 = sbr.rel (%p170) target = $region36
    $region35: #{tpu_custom_call.1} parent=5 // pred_region
      %s173 = ssub.s32 %s8, 2
      // Predicated region
      $region37: #{tpu_custom_call.1} parent=35 // pred_check
        %p174 = pneg %p84
      $region38: #{tpu_custom_call.1} parent=35 // pred_check_branch
        %176 = sbr.rel (%p174) target = $region40
      $region39: #{tpu_custom_call.1} parent=35 // pred_region
        %p177 = scmp.lt.s32.totalorder %s14, 1
        %s178 = scalar_select %p177, %s14, 1
        %s179 = smul.addr %s178, 2
        %s180 = smul.addr %s179, 8
        %s181 = scalar_lea.vmem %s2, %s180
      $region40: #{tpu_custom_call.1} parent=35 // pred_fallthru
        _
    $region36: #{tpu_custom_call.1} parent=5 // pred_fallthru
      _
  $region6: #{tpu_custom_call.1} parent=0 // loop_footer
    %s12 = sadd.s32 1, %s8
  $region7: #{tpu_custom_call.1} parent=0 // loop_footer_branch
    %7 = sbr.rel target = $region3
  $region8: #{tpu_custom_call.1} parent=0 // loop_exit
    _

</llo_original>
